<compile_context>
chip_gen: v7x
topology: tpu7x:2x2x1
jax: 0.10.0
libtpu: 0.0.40
codegen_flags: <defaults>
</compile_context>

<pallas_src>
import jax
import jax.numpy as jnp
from jax.experimental import pallas as pl
from jax.experimental.pallas import tpu as pltpu

# Per-step input-tile element cap.  f32: tm*c = 512K elems -> 2 MiB in + 4 MiB out
# per buffer, ~12.6 MiB double-buffered pipeline; fits every generation with the
# explicit 32 MiB vmem limit below (v5e/v6e: 128 MiB physical, v7x: 64 MiB).
_MAX_BLOCK_ELEMS = 512 * 1024
_VMEM_LIMIT_BYTES = 32 * 1024 * 1024


def _cat_tanh_relu_kernel(x_ref, o_ref):
    # x_ref: (TM, C) tile of the flattened input slab.
    # o_ref: (2, TM, C) tile of the duplicated output (cat([x, x], dim=0) in flat form).
    # Compute in the input dtype (f32 here): v5e has no bf16 VPU/EUP and the kernel
    # is HBM-bound on v5e/v6e.  (A bf16-tanh variant is a v7x-only EUP tweak.)
    v = jnp.maximum(jnp.tanh(x_ref[...]), 0.0).astype(o_ref.dtype)
    # torch.cat([x, x], dim=0): identical data into both halves — aligned full-tile stores.
    o_ref[0, :, :] = v
    o_ref[1, :, :] = v


def _sublane_multiple(dtype):
    # Packed sublane multiple: 8 for 32-bit, 16 for 16-bit, 32 for 8-bit dtypes.
    return max(8, 32 // jnp.dtype(dtype).itemsize)


def _pick_lane_width(total):
    # Largest multiple of 128 (up to 1024) that divides `total`; None if 128 ∤ total.
    for k in (8, 6, 4, 3, 2, 1):
        c = 128 * k
        if total % c == 0:
            return c
    return None


def _pick_tm(r, c, sub):
    # VMEM-capped row-tile size, rounded to the packed sublane multiple.
    cap = max(sub, (_MAX_BLOCK_ELEMS // c) // sub * sub)
    if r > cap:
        return cap  # grid >= 2 automatically
    # Small/medium slabs: aim for ~8 grid steps (>=2) so the pipeline overlaps and
    # v7x can shard the "parallel" axis across both TensorCores.
    for steps in (8, 4, 2):
        tm = ((pl.cdiv(r, steps) + sub - 1) // sub) * sub
        if tm < r:
            return tm
    return r  # tiny input: single full-extent tile


def _run_kernel(x2d, dtype, total):
    r, c = x2d.shape
    sub = _sublane_multiple(dtype)
    tm = _pick_tm(r, c, sub)
    grid = (pl.cdiv(r, tm),)
    itemsize = jnp.dtype(dtype).itemsize
    return pl.pallas_call(
        _cat_tanh_relu_kernel,
        out_shape=jax.ShapeDtypeStruct((2, r, c), dtype),
        grid=grid,
        in_specs=[pl.BlockSpec((tm, c), lambda i: (i, 0))],
        out_specs=pl.BlockSpec((2, tm, c), lambda i: (0, i, 0)),
        compiler_params=pltpu.CompilerParams(
            dimension_semantics=("parallel",),
            vmem_limit_bytes=_VMEM_LIMIT_BYTES,
        ),
        cost_estimate=pl.CostEstimate(
            flops=2 * total,
            transcendentals=total,
            bytes_accessed=3 * total * itemsize,  # 1 read + 2 duplicated writes
        ),
    )(x2d)


def model_forward(x):
    """JAX/Pallas equivalent of Model.forward."""
    n, d = x.shape
    assert n % 3 == 0 and d % 2 == 0, "view arithmetic requires N % 3 == 0 and D % 2 == 0"

    total = n * d
    c = _pick_lane_width(total)

    if c is not None:
        # Common case: fully zero-copy.  Flatten row-major (same element order as
        # torch's contiguous layout) into a lane-dense (r, c) slab.
        r = total // c
        x2d = jnp.reshape(x, (r, c))
        out = _run_kernel(x2d, x.dtype, total)
        # flat(cat([f(x), f(x)], dim=0)) == [flat(f(x)), flat(f(x))] — zero-copy reshape.
        cat_flat = jnp.reshape(out, (2 * total,))
    else:
        # Rare fallback (total not a multiple of 128): pad the flat slab by <=127
        # elements (tanh(0)=relu(0)=0, benign), run the same kernel at c=128, and
        # slice the padding off each half afterwards.  The slice copies 2*total
        # elements; only mid-buffer padding makes this unavoidable without a much
        # more elaborate assembly path, and it only affects tiny/odd shapes.
        c = 128
        padded_total = pl.cdiv(total, c) * c
        x_flat = jnp.pad(jnp.reshape(x, (-1,)), (0, padded_total - total))
        x2d = jnp.reshape(x_flat, (padded_total // c, c))
        out = _run_kernel(x2d, x.dtype, total)
        cat_flat = jnp.reshape(jnp.reshape(out, (2, padded_total))[:, :total], (-1,))

    # x.view(2*shape0, -1) then x.view(-1, 3*shape1): zero-copy row-major reshapes;
    # relu already applied inside the kernel (elementwise, commutes with reshape).
    return jnp.reshape(cat_flat, (-1, 3 * (d // 2)))


def _reference(a):
    n, d = a.shape
    y = jnp.concatenate([a, a], axis=0)
    return jnp.maximum(jnp.reshape(jnp.tanh(y), (-1, 3 * (d // 2))), 0.0)


if __name__ == "__main__":
    key = jax.random.PRNGKey(0)

    # Main case: N % 3 == 0, D even; total = 24576 = 24 * 1024 -> zero-copy slab
    # (24, 1024), tm = 8, grid = (3,) exercising the pipelined/parallel path.
    N, D = 192, 128
    x = jax.random.normal(key, (N, D), dtype=jnp.float32)
    out = jax.block_until_ready(model_forward(x))

    # Also exercise the non-128-divisible fallback at a tiny shape (total = 60).
    N2, D2 = 6, 10
    x2 = jax.random.normal(jax.random.PRNGKey(1), (N2, D2), dtype=jnp.float32)
    out2 = jax.block_until_ready(model_forward(x2))

    assert out.shape == (4 * N // 3, 3 * (D // 2)), out.shape
    assert out2.shape == (4 * N2 // 3, 3 * (D2 // 2)), out2.shape
    assert jnp.allclose(out, _reference(x), atol=1e-6), "mismatch vs reference (main path)"
    assert jnp.allclose(out2, _reference(x2), atol=1e-6), "mismatch vs reference (fallback path)"

    print("KERNEL_OK")
</pallas_src>

<mosaic_0001>
module attributes {stable_mosaic.version = 11 : i64} {
  func.func @_cat_tanh_relu_kernel(%arg0: i32, %arg1: memref<8x1024xf32, #tpu.memory_space<vmem>>, %arg2: memref<2x8x1024xf32, #tpu.memory_space<vmem>>) attributes {dimension_semantics = [#tpu.dimension_semantics<parallel>], iteration_bounds = array<i64: 3>, scalar_prefetch = 0 : i64, scratch_operands = 0 : i64, tpu.core_type = #tpu.core_type<tc>, window_params = [{transform_indices = @transform_0, window_bounds = array<i64: 8, 1024>}, {transform_indices = @transform_1, window_bounds = array<i64: 2, 8, 1024>}]} {
    %c0 = arith.constant 0 : index
    %c0_0 = arith.constant 0 : index
    %0 = vector.load %arg1[%c0, %c0_0] : memref<8x1024xf32, #tpu.memory_space<vmem>>, vector<8x1024xf32>
    %1 = math.tanh %0 : vector<8x1024xf32>
    %cst = arith.constant 0.000000e+00 : f32
    %2 = vector.broadcast %cst : f32 to vector<8x1024xf32>
    %3 = arith.maximumf %1, %2 : vector<8x1024xf32>
    %c0_1 = arith.constant 0 : index
    %c0_2 = arith.constant 0 : index
    %c0_3 = arith.constant 0 : index
    %4 = vector.load %arg2[%c0_1, %c0_2, %c0_3] : memref<2x8x1024xf32, #tpu.memory_space<vmem>>, vector<1x8x1024xf32>
    %5 = vector.shape_cast %4 : vector<1x8x1024xf32> to vector<8x1024xf32>
    %6 = vector.shape_cast %3 : vector<8x1024xf32> to vector<1x8x1024xf32>
    tpu.vector_store %arg2[%c0_1, %c0_2, %c0_3], %6 {strides = array<i32>} : memref<2x8x1024xf32, #tpu.memory_space<vmem>>, vector<1x8x1024xf32>,
    %c1 = arith.constant 1 : index
    %c0_4 = arith.constant 0 : index
    %c0_5 = arith.constant 0 : index
    %7 = vector.load %arg2[%c1, %c0_4, %c0_5] : memref<2x8x1024xf32, #tpu.memory_space<vmem>>, vector<1x8x1024xf32>
    %8 = vector.shape_cast %7 : vector<1x8x1024xf32> to vector<8x1024xf32>
    %9 = vector.shape_cast %3 : vector<8x1024xf32> to vector<1x8x1024xf32>
    tpu.vector_store %arg2[%c1, %c0_4, %c0_5], %9 {strides = array<i32>} : memref<2x8x1024xf32, #tpu.memory_space<vmem>>, vector<1x8x1024xf32>,
    return
  }
  func.func @transform_0(%arg0: i32) -> (i32, i32) {
    %c0_i32 = arith.constant 0 : i32
    %c0_i32_0 = arith.constant 0 : i32
    return %arg0, %c0_i32 : i32, i32
  }
  func.func @transform_1(%arg0: i32) -> (i32, i32, i32) {
    %c0_i32 = arith.constant 0 : i32
    %c0_i32_0 = arith.constant 0 : i32
    %c0_i32_1 = arith.constant 0 : i32
    return %c0_i32, %arg0, %c0_i32_0 : i32, i32, i32
  }
}

</mosaic_0001>

<llo_original>
// kernel: tpu_custom_call.1
$region0: #{tpu_custom_call.1}
  #allocation0 [shape = 'u32[]', space=smem, size = 0x4, offset = 0x4, fixed_abs, tag = 'smem constant byte address 0x4 - core index']
  #allocation1 [shape = 'u32[144,128]{1,0:T(1,128)}', space=vmem, size = 0x12000, scoped, tag = 'internal scratch']
  %s0 = inlined_call_operand.hbm [shape: f32[24,1024], index: 0, kind: input, shape index: {}]
  %s1 = inlined_call_operand.hbm [shape: f32[2,24,1024], index: 1, kind: output, shape index: {}]
  %s2 = sld [smem:[#allocation0]]
  $region41: #{tpu_custom_call.1} parent=0
    _
  %s4 = ssub.s32 1, %s2
  %s5 = scalar_select 0, %s4, %s2
  $region1: #{tpu_custom_call.1} parent=0
    #allocation2 [shape = 'u8[65536]{0}', space=vmem, size = 0x10000, scoped, tag = 'input window, operand 0']
    #allocation3 [shape = 's32[2]{0}', space=sflag, size = 0x8, scoped, tag = 'scoped memory for tpu_custom_call.1']
    #allocation4 [shape = 's32[2]{0}', space=sflag, size = 0x8, scoped, tag = 'scoped memory for tpu_custom_call.1']
    #allocation5 [shape = 'u8[131072]{0}', space=vmem, size = 0x20000, scoped, tag = 'output window, operand 0']
    %6 = vsyncpa [#allocation3], 0
    %s7 = scalar_lea.sflag [#allocation3], 1
    %8 = vsyncpa %s7, 0
    %9 = vsyncpa [#allocation4], 0
    %s10 = scalar_lea.sflag [#allocation4], 1
    %11 = vsyncpa %s10, 0
    loop: start=0, step=1, limit=5
    $region2: #{tpu_custom_call.1} parent=1 // loop_pre_header
      _
    $region3: #{tpu_custom_call.1} parent=1 // loop_header
      %s13 = sphi 0, %s17
      %p14 = scmp.ge.s32.totalorder %s13, 5
      %s23 = sphi 0, %s25
      %s26 = sphi 0, %s23
      %s27 = sphi 0, %s26
      %s43 = sphi 0, %s27
      %s49 = sphi 0, %s51
      %s52 = sphi 0, %s49
      %s53 = sphi 0, %s52
      %s69 = sphi 0, %s53
    $region4: #{tpu_custom_call.1} parent=1 // loop_header_branch
      %16 = sbr.rel (%p14) target = $region8
    $region5: #{tpu_custom_call.1} parent=1 // loop_body
      %s18 = ssub.s32 %s13, 1
      %s19 = ssub.s32 %s13, 2
      %s20 = sadd.s32 %s13, 1
      %s21 = ssub.s32 %s13, %s20
      %p22 = scmp.eq.s32.totalorder %s21, 0
      %s24 = sadd.s32 %s23, 1
      %s25 = scalar_select %p22, %s23, %s24
      %p28 = pneg %p22
      %p29 = scmp.eq.s32.totalorder %s13, 2
      %p30 = por %p28, %p29
      %p31 = scmp.ne.s32.totalorder %s23, %s26
      %p32 = scmp.eq.s32.totalorder %s13, 0
      %p33 = por %p31, %p32
      %p34 = scmp.ne.s32.totalorder %s23, %s26
      %p35 = scmp.eq.s32.totalorder %s18, 2
      %p36 = por %p34, %p35
      %p37 = scmp.ne.s32.totalorder %s26, %s27
      %p38 = scmp.eq.s32.totalorder %s18, 0
      %p39 = por %p37, %p38
      %p40 = scmp.ne.s32.totalorder %s26, %s27
      %p41 = scmp.eq.s32.totalorder %s19, 2
      %p42 = por %p40, %p41
      %p44 = scmp.ne.s32.totalorder %s27, %s43
      %p45 = scmp.eq.s32.totalorder %s19, 0
      %p46 = por %p44, %p45
      %s47 = ssub.s32 %s13, %s20
      %p48 = scmp.eq.s32.totalorder %s47, 0
      %s50 = sadd.s32 %s49, 1
      %s51 = scalar_select %p48, %s49, %s50
      %p54 = pneg %p48
      %p55 = scmp.eq.s32.totalorder %s13, 2
      %p56 = por %p54, %p55
      %p57 = scmp.ne.s32.totalorder %s49, %s52
      %p58 = scmp.eq.s32.totalorder %s13, 0
      %p59 = por %p57, %p58
      %p60 = scmp.ne.s32.totalorder %s49, %s52
      %p61 = scmp.eq.s32.totalorder %s18, 2
      %p62 = por %p60, %p61
      %p63 = scmp.ne.s32.totalorder %s52, %s53
      %p64 = scmp.eq.s32.totalorder %s18, 0
      %p65 = por %p63, %p64
      %p66 = scmp.ne.s32.totalorder %s52, %s53
      %p67 = scmp.eq.s32.totalorder %s19, 2
      %p68 = por %p66, %p67
      %p70 = scmp.ne.s32.totalorder %s53, %s69
      %p71 = scmp.eq.s32.totalorder %s19, 0
      %p72 = por %p70, %p71
      %p73 = scmp.le.s32.totalorder 1, %s13
      %p74 = scmp.lt.s32.totalorder %s13, 4
      %p75 = pnand %p73, %p74
      %p76 = pneg %p75
      // Predicated region
      $region9: #{tpu_custom_call.1} parent=5 // pred_check
        _
      $region10: #{tpu_custom_call.1} parent=5 // pred_check_branch
        %78 = sbr.rel (%p75) target = $region12
      $region11: #{tpu_custom_call.1} parent=5 // pred_region
        %s79 = ssub.s32 %s13, 1
      $region12: #{tpu_custom_call.1} parent=5 // pred_fallthru
        _
      %p80 = scmp.lt.s32.totalorder %s13, 3
      // Predicated region
      $region13: #{tpu_custom_call.1} parent=5 // pred_check
        %p81 = pneg %p80
      $region14: #{tpu_custom_call.1} parent=5 // pred_check_branch
        %83 = sbr.rel (%p81) target = $region16
      $region15: #{tpu_custom_call.1} parent=5 // pred_region
        // Predicated region
        $region17: #{tpu_custom_call.1} parent=15 // pred_check
          %p84 = pneg %p33
        $region18: #{tpu_custom_call.1} parent=15 // pred_check_branch
          %86 = sbr.rel (%p84) target = $region20
        $region19: #{tpu_custom_call.1} parent=15 // pred_region
          %s87 = sand.u32 %s23, 1
          %s88 = scalar_lea.sflag [#allocation3], %s87
          %s89 = sand.u32 %s23, 1
          %s90 = smul.addr %s89, 64
          %s91 = scalar_lea.vmem [#allocation2], %s90
          %s93 = ssub.s32 1024, 1024
          %94 = vsyncadd %s88, %s93
          %s95 = smul.addr %s13, 8
          %s96 = smul.addr %s95, 128
          %s97 = scalar_lea.hbm %s0, %s96
          %s99 = sshll.u32 %s91, 4
          %s100 = int_to_ptr.vmem [resolvable:$true] %s99
          %102 = dma.hbm_to_vmem [thread:$0]  %s97, 1024, %s100, %s88
        $region20: #{tpu_custom_call.1} parent=15 // pred_fallthru
          _
      $region16: #{tpu_custom_call.1} parent=5 // pred_fallthru
        _
      %p103 = scmp.le.s32.totalorder 1, %s13
      %p104 = scmp.lt.s32.totalorder %s13, 4
      %p105 = pnand %p103, %p104
      %p106 = pneg %p105
      // Predicated region
      $region21: #{tpu_custom_call.1} parent=5 // pred_check
        _
      $region22: #{tpu_custom_call.1} parent=5 // pred_check_branch
        %108 = sbr.rel (%p105) target = $region24
      $region23: #{tpu_custom_call.1} parent=5 // pred_region
        %s109 = ssub.s32 %s13, 1
        %s110 = sand.u32 %s26, 1
        %s111 = scalar_lea.sflag [#allocation3], %s110
        %s112 = sand.u32 %s26, 1
        %s113 = smul.addr %s112, 64
        %s114 = scalar_lea.vmem [#allocation2], %s113
        // Predicated region
        $region25: #{tpu_custom_call.1} parent=23 // pred_check
          %p115 = pneg %p39
        $region26: #{tpu_custom_call.1} parent=23 // pred_check_branch
          %117 = sbr.rel (%p115) target = $region28
        $region27: #{tpu_custom_call.1} parent=23 // pred_region
          %118 = dma.done %s111, 1024
        $region28: #{tpu_custom_call.1} parent=23 // pred_fallthru
          _
        %s119 = sand.u32 %s26, 1
        %s120 = scalar_lea.sflag [#allocation3], %s119
        %s121 = sand.u32 %s26, 1
        %s122 = smul.addr %s121, 64
        %s123 = scalar_lea.vmem [#allocation2], %s122
        %p124 = pneg %p39
        %p125 = pneg %p36
        %p126 = pneg %p65
        %p127 = pneg %p62
        %s128 = sand.u32 %s52, 1
        %s129 = scalar_lea.sflag [#allocation4], %s128
        %s130 = sand.u32 %s52, 1
        %s131 = smul.addr %s130, 128
        %s132 = scalar_lea.vmem [#allocation5], %s131
        %v133 = vld [vmem:[%s114] sm:$0xff]
        %v134 = vld [vmem:[%s114 + $0x8] sm:$0xff]
        %v135 = vld [vmem:[%s114 + $0x10] sm:$0xff]
        %v136 = vld [vmem:[%s114 + $0x18] sm:$0xff]
        %v137 = vld [vmem:[%s114 + $0x20] sm:$0xff]
        %v138 = vld [vmem:[%s114 + $0x28] sm:$0xff]
        %v139 = vld [vmem:[%s114 + $0x30] sm:$0xff]
        %v140 = vld [vmem:[%s114 + $0x38] sm:$0xff]
        %v141 = vtanh.pop %v133
        %v142 = vtanh.pop %v134
        %v143 = vtanh.pop %v135
        %v144 = vtanh.pop %v136
        %v145 = vtanh.pop %v137
        %v146 = vtanh.pop %v138
        %v147 = vtanh.pop %v139
        %v148 = vtanh.pop %v140
        %v149 = vmax.f32 %v141, 0.0
        %v150 = vmax.f32 %v142, 0.0
        %v151 = vmax.f32 %v143, 0.0
        %v152 = vmax.f32 %v144, 0.0
        %v153 = vmax.f32 %v145, 0.0
        %v154 = vmax.f32 %v146, 0.0
        %v155 = vmax.f32 %v147, 0.0
        %v156 = vmax.f32 %v148, 0.0
        %157 = vst [vmem:[%s132] sm:$0xff] %v149
        %158 = vst [vmem:[%s132 + $0x8] sm:$0xff] %v150
        %159 = vst [vmem:[%s132 + $0x10] sm:$0xff] %v151
        %160 = vst [vmem:[%s132 + $0x18] sm:$0xff] %v152
        %161 = vst [vmem:[%s132 + $0x20] sm:$0xff] %v153
        %162 = vst [vmem:[%s132 + $0x28] sm:$0xff] %v154
        %163 = vst [vmem:[%s132 + $0x30] sm:$0xff] %v155
        %164 = vst [vmem:[%s132 + $0x38] sm:$0xff] %v156
        %s165 = scalar_lea.vmem %s132, 64 [#allocation5]
        %166 = vst [vmem:[%s165] sm:$0xff] %v149
        %167 = vst [vmem:[%s165 + $0x8] sm:$0xff] %v150
        %168 = vst [vmem:[%s165 + $0x10] sm:$0xff] %v151
        %169 = vst [vmem:[%s165 + $0x18] sm:$0xff] %v152
        %170 = vst [vmem:[%s165 + $0x20] sm:$0xff] %v153
        %171 = vst [vmem:[%s165 + $0x28] sm:$0xff] %v154
        %172 = vst [vmem:[%s165 + $0x30] sm:$0xff] %v155
        %173 = vst [vmem:[%s165 + $0x38] sm:$0xff] %v156
        %s174 = sand.u32 %s52, 1
        %s175 = scalar_lea.sflag [#allocation4], %s174
        %s176 = sand.u32 %s52, 1
        %s177 = smul.addr %s176, 128
        %s178 = scalar_lea.vmem [#allocation5], %s177
        // Predicated region
        $region29: #{tpu_custom_call.1} parent=23 // pred_check
          %p179 = pneg %p62
        $region30: #{tpu_custom_call.1} parent=23 // pred_check_branch
          %181 = sbr.rel (%p179) target = $region32
        $region31: #{tpu_custom_call.1} parent=23 // pred_region
          %s183 = ssub.s32 2048, 2048
          %184 = vsyncadd %s175, %s183
          %s185 = smul.addr %s18, 8
          %s186 = smul.addr %s185, 128
          %s187 = scalar_lea.hbm %s1, %s186
          %s188 = sshll.u32 %s178, 4
          %s189 = int_to_ptr.vmem [resolvable:$true] %s188
          %194 = dma.vmem_to_hbm [thread:$0]  %s189, 2048, %s187, %s175, 1024, 3072, 64
        $region32: #{tpu_custom_call.1} parent=23 // pred_fallthru
          _
      $region24: #{tpu_custom_call.1} parent=5 // pred_fallthru
        _
      %p195 = scmp.le.s32.totalorder 2, %s13
      // Predicated region
      $region33: #{tpu_custom_call.1} parent=5 // pred_check
        %p196 = pneg %p195
      $region34: #{tpu_custom_call.1} parent=5 // pred_check_branch
        %198 = sbr.rel (%p196) target = $region36
      $region35: #{tpu_custom_call.1} parent=5 // pred_region
        %s199 = ssub.s32 %s13, 2
        // Predicated region
        $region37: #{tpu_custom_call.1} parent=35 // pred_check
          %p200 = pneg %p68
        $region38: #{tpu_custom_call.1} parent=35 // pred_check_branch
          %202 = sbr.rel (%p200) target = $region40
        $region39: #{tpu_custom_call.1} parent=35 // pred_region
          %s203 = sand.u32 %s53, 1
          %s204 = scalar_lea.sflag [#allocation4], %s203
          %s205 = sand.u32 %s53, 1
          %s206 = smul.addr %s205, 128
          %s207 = scalar_lea.vmem [#allocation5], %s206
          %208 = dma.done %s204, 2048
        $region40: #{tpu_custom_call.1} parent=35 // pred_fallthru
          _
      $region36: #{tpu_custom_call.1} parent=5 // pred_fallthru
        _
    $region6: #{tpu_custom_call.1} parent=1 // loop_footer
      %s17 = sadd.s32 1, %s13
    $region7: #{tpu_custom_call.1} parent=1 // loop_footer_branch
      %12 = sbr.rel target = $region3
    $region8: #{tpu_custom_call.1} parent=1 // loop_exit
      _
    %209 = vsyncpa [#allocation3], 1
    %s210 = scalar_lea.sflag [#allocation3], 1
    %211 = vsyncpa %s210, 1
    %212 = vsyncpa [#allocation4], 1
    %s213 = scalar_lea.sflag [#allocation4], 1
    %214 = vsyncpa %s213, 1

</llo_original>
